<compile_context>
chip_gen: v7x
topology: tpu7x:2x2x1
jax: 0.10.0
libtpu: 0.0.40
codegen_flags: <defaults>
</compile_context>

<pallas_src>
import functools

import jax
import jax.numpy as jnp
from jax import lax
from jax.experimental import pallas as pl
from jax.experimental.pallas import tpu as pltpu

SINKHORN_ITERS = 8
TEMPERATURE = 1.0
EPS = 1e-10


def _vmem_limit_bytes():
    """Generation-aware scoped-VMEM budget (~80% of physical, conservative fallback)."""
    try:
        cap = getattr(pltpu.get_tpu_info(), "vmem_capacity_bytes", None)
    except Exception:
        cap = None
    if not cap:
        cap = 64 * 1024 * 1024
    return int(min(cap * 4 // 5, 112 * 1024 * 1024))


def _pick_token_tile(n, max_tile=512):
    """Largest tile <= max_tile dividing n; prefer lane-dense multiples of 128."""
    if n <= max_tile:
        return n
    for t in range((max_tile // 128) * 128, 0, -128):
        if n % t == 0:
            return t
    for t in range((max_tile // 16) * 16, 0, -16):
        if n % t == 0:
            return t
    return n


# ----------------------------------------------------------------------------
# Kernel 1: token-tiled fused gating matmul (all heads) + in-place prob-domain
#           sinkhorn on the resident, expert-major gate buffer.
# ----------------------------------------------------------------------------
def _gate_sinkhorn_kernel(x_ref, w_ref, g_ref, *, heads, experts,
                          num_iters, temperature, eps):
    # x_ref : (tn, D)          bf16 -- streamed token tile
    # w_ref : (H*E, D)         bf16 -- resident (constant block index)
    # g_ref : (H, T, E, tn)    f32  -- resident gate accumulator / output
    i = pl.program_id(0)

    # ONE fused matmul for all heads/experts of this tile (MXU fill paid once).
    s = lax.dot_general(w_ref[...], x_ref[...],
                        dimension_numbers=(((1,), (1,)), ((), ())),
                        preferred_element_type=jnp.float32)          # (H*E, tn)
    for h in range(heads):                                           # tiny static loop
        g_ref[h, i] = s[h * experts:(h + 1) * experts]               # (E, tn) store

    @pl.when(i == pl.num_programs(0) - 1)
    def _finalize():
        # torch: t = clamp(g, eps).log() / temperature, then alternating logsumexp
        # normalizations; here the identical recurrence in probability domain.
        p = jnp.maximum(g_ref[...], eps)
        if temperature != 1.0:
            p = jnp.exp(jnp.log(p) * (1.0 / temperature))
        g_ref[...] = p

        @pl.loop(0, num_iters - 1)
        def _iter(_):
            q = g_ref[...]
            # tokens: reduce the tile axis (VPU vreg adds) BEFORE the lane axis (XLU)
            tok = jnp.sum(jnp.sum(q, axis=1, keepdims=True), axis=3, keepdims=True)
            q = q * pl.reciprocal(tok, approx=True)
            # experts: sublane reduction
            exp = jnp.sum(q, axis=2, keepdims=True)
            g_ref[...] = q * pl.reciprocal(exp, approx=True)

        # Final iteration with exact division (keeps the >0.5 hard-gate threshold
        # robust against accumulated approx-reciprocal error).
        q = g_ref[...]
        tok = jnp.sum(jnp.sum(q, axis=1, keepdims=True), axis=3, keepdims=True)
        q = q / tok
        exp = jnp.sum(q, axis=2, keepdims=True)
        g_ref[...] = q / exp


def gate_and_sinkhorn(x_bf16, w_gate, *, heads, experts, num_iters=SINKHORN_ITERS,
                      temperature=TEMPERATURE, max_token_tile=512):
    """x_bf16: (NT, D) bf16, w_gate: (H*E, D) bf16 -> competitive gates (H, E, NT) f32."""
    NT, D = x_bf16.shape
    HE = w_gate.shape[0]
    assert HE == heads * experts
    tn = _pick_token_tile(NT, max_token_tile)
    T = NT // tn
    vlim = _vmem_limit_bytes()
    resident = heads * experts * NT * 4 + HE * D * 2 + 3 * tn * D * 2
    # TODO(synk): chunked two-pass sinkhorn fallback when the resident gate matrix
    # (H*E*NT*4 bytes) no longer fits VMEM (very large NT * E).
    assert resident < vlim, f"resident gates {resident}B exceed VMEM budget {vlim}B"

    kernel = functools.partial(_gate_sinkhorn_kernel, heads=heads, experts=experts,
                               num_iters=num_iters, temperature=temperature, eps=EPS)
    g4 = pl.pallas_call(
        kernel,
        out_shape=jax.ShapeDtypeStruct((heads, T, experts, tn), jnp.float32),
        grid_spec=pltpu.PrefetchScalarGridSpec(
            num_scalar_prefetch=0,
            grid=(T,),
            # NOTE: bump to pipeline_mode=pl.Buffered(3) on the x spec if profiling
            # still shows exposed DMA behind the (cheap) per-tile matmul.
            in_specs=[pl.BlockSpec((tn, D), lambda i: (i, 0)),          # x: streamed bf16 tiles
                      pl.BlockSpec((HE, D), lambda i: (0, 0))],         # w: resident
            out_specs=pl.BlockSpec((heads, T, experts, tn), lambda i: (0, 0, 0, 0))),
        compiler_params=pltpu.CompilerParams(
            dimension_semantics=("arbitrary",),
            vmem_limit_bytes=vlim),
    )(x_bf16, w_gate)
    # (H, T, E, tn) -> expert-major (H, E, NT); token id = tile * tn + pos.
    # (HBM transpose cost is negligible for small H*E; see review note.)
    return jnp.transpose(g4, (0, 2, 1, 3)).reshape(heads, experts, NT)


# ----------------------------------------------------------------------------
# Kernel 2: per-(head, expert) double-buffered DMA gather of routed token rows
#           from HBM + bf16 expert matmul.
# ----------------------------------------------------------------------------
def _expert_kernel(idx_ref, x_hbm, w_ref, out_ref, xbuf, sem_ref, *, tokens_per_expert):
    # idx_ref : SMEM (G*m,) int32   -- scalar-prefetched flat top-k token ids (step-major)
    # x_hbm   : (NT, D) f32 in HBM (memory_space=ANY); rows gathered via manual DMA
    #           (kept f32: 1-row bf16 DMA would hit packed-subword writes; kernel is
    #            latency-bound so the byte saving is immaterial here)
    # w_ref   : (1, D, d_out) bf16 ; out_ref : (1, m, d_out) f32
    # xbuf    : VMEM (2, m, D) f32 double buffer ; sem_ref : DMA semaphores (2,)
    m = tokens_per_expert
    s = pl.program_id(0)
    nsteps = pl.num_programs(0)
    slot = lax.rem(s, 2)

    def gather(step, sl):
        base = step * m
        for i in range(m):                               # static unroll: issue row DMAs
            tok = idx_ref[base + i]
            pltpu.make_async_copy(x_hbm.at[pl.ds(tok, 1)],
                                  xbuf.at[sl, pl.ds(i, 1)],
                                  sem_ref.at[sl]).start()

    @pl.when(s == 0)
    def _prime():                                        # first step fills its own slot
        gather(s, slot)

    @pl.when(s + 1 < nsteps)
    def _prefetch():                                     # next (h,e)'s rows land during matmul
        gather(s + 1, 1 - slot)

    for i in range(m):                                   # drain this step's gathers
        pltpu.make_async_copy(x_hbm.at[pl.ds(0, 1)],
                              xbuf.at[slot, pl.ds(i, 1)],
                              sem_ref.at[slot]).wait()

    rows = xbuf[slot].astype(jnp.bfloat16)               # (m, D)
    out_ref[0] = jnp.dot(rows, w_ref[0], preferred_element_type=jnp.float32)
    # Eval-mode hard 0/1 gate is folded into the scatter epilogue in the wrapper.


def expert_forward(routed_idx_flat, x_flat, w_flat, *, tokens_per_expert):
    """routed_idx_flat: (G*m,) int32, x_flat: (NT, D) f32, w_flat: (G, D, d_out) bf16."""
    G, D, d_out = w_flat.shape
    m = tokens_per_expert
    kernel = functools.partial(_expert_kernel, tokens_per_expert=m)
    return pl.pallas_call(
        kernel,
        out_shape=jax.ShapeDtypeStruct((G, m, d_out), jnp.float32),
        grid_spec=pltpu.PrefetchScalarGridSpec(
            num_scalar_prefetch=1,
            grid=(G,),
            in_specs=[pl.BlockSpec(memory_space=pl.ANY),               # x stays in HBM
                      pl.BlockSpec((1, D, d_out), lambda s, idx: (s, 0, 0))],
            out_specs=pl.BlockSpec((1, m, d_out), lambda s, idx: (s, 0, 0)),
            scratch_shapes=[pltpu.VMEM((2, m, D), x_flat.dtype),
                            pltpu.SemaphoreType.DMA((2,))]),
        compiler_params=pltpu.CompilerParams(
            # double buffer => cross-step dependency, must stay on one core
            dimension_semantics=("arbitrary",),
            vmem_limit_bytes=_vmem_limit_bytes()),
    )(routed_idx_flat, x_flat, w_flat)


# ----------------------------------------------------------------------------
# Full SinkhornRouter.forward (routed path, eval mode, competitive=True)
# ----------------------------------------------------------------------------
def sinkhorn_router_forward(x, gate_w, experts_w, *, num_iters=SINKHORN_ITERS,
                            temperature=TEMPERATURE, extra_tokens_per_expert=0):
    """x: (B, N, D); gate_w: (H, D, E); experts_w: (E, i, o) or (E, H, i, o)."""
    B, N, D = x.shape
    if experts_w.ndim == 3:
        experts_w = experts_w[:, None]                    # 'e i o -> e 1 i o'
    E, H, d_in, d_out = experts_w.shape
    assert d_in == D

    # TODO(synk): seq padding + mask branch (seq_pad > 0), gumbel noise and the
    # training-mode straight-through soft gates are not implemented (eval-only fwd).
    assert N % E == 0
    m = N // E + extra_tokens_per_expert
    NT = B * N

    x_flat = x.reshape(NT, D)                             # f32: kernel-2 gather source
    x_bf16 = x_flat.astype(jnp.bfloat16)                  # kernel-1 streamed operand

    # gating weight -> (H*E, D) bf16 so all heads fuse into one MXU matmul per tile
    w_gate = jnp.transpose(gate_w, (0, 2, 1)).reshape(H * E, D).astype(jnp.bfloat16)

    # --- Pallas kernel 1: fused gating matmul + in-place sinkhorn ---
    cg = gate_and_sinkhorn(x_bf16, w_gate, heads=H, experts=E,
                           num_iters=num_iters, temperature=temperature)   # (H, E, NT)

    # top-k tokens per expert; capacity N//E applied over the flattened (b n) token
    # axis exactly as the PyTorch reference does after 'b h n d -> h (b n) d'.
    gate_vals, routed_idx = lax.top_k(cg, m)                                # (H, E, m)
    hard_gates = (gate_vals > 0.5).astype(jnp.float32)                      # eval-mode gates
    # TODO(synk): top_k + scatter-mean epilogue still runs in XLA; profile and port.

    # --- Pallas kernel 2: double-buffered row gather + per-(h,e) expert matmul ---
    w_experts = jnp.transpose(experts_w, (1, 0, 2, 3)).reshape(H * E, D, d_out)
    w_experts = w_experts.astype(jnp.bfloat16)
    outputs = expert_forward(routed_idx.reshape(H * E * m).astype(jnp.int32),
                             x_flat, w_experts,
                             tokens_per_expert=m).reshape(H, E, m, d_out)

    # hard gate folded here; scatter_reduce(dim=-2, 'mean', include_self=True) on zeros
    src = (outputs * hard_gates[..., None]).transpose(0, 2, 1, 3).reshape(H, m * E, d_out)
    idx_flat = jnp.transpose(routed_idx, (0, 2, 1)).reshape(H, m * E)

    def scatter_head(idx_h, src_h):
        sums = jnp.zeros((NT, d_out), jnp.float32).at[idx_h].add(src_h)
        counts = jnp.zeros((NT,), jnp.float32).at[idx_h].add(1.0)
        return sums / (counts[:, None] + 1.0)             # include_self=True with self=0

    routed_back = jax.vmap(scatter_head)(idx_flat, src)   # (H, NT, d_out)
    routed_back = routed_back.reshape(H, B, N, d_out).transpose(1, 0, 2, 3)
    if H == 1:
        routed_back = routed_back[:, 0]
    return routed_back


# ----------------------------------------------------------------------------
if __name__ == "__main__":
    B, N, D_IN, D_OUT, E, H = 4, 128, 256, 128, 8, 2

    key = jax.random.PRNGKey(0)
    k_x, k_gate, k_exp = jax.random.split(key, 3)
    x = jax.random.normal(k_x, (B, N, D_IN), dtype=jnp.float32)
    gate_w = jax.random.normal(k_gate, (H, D_IN, E), dtype=jnp.float32)      # Gating weight
    experts_w = 0.02 * jax.random.normal(k_exp, (E, H, D_IN, D_OUT), jnp.float32)

    out = jax.block_until_ready(sinkhorn_router_forward(x, gate_w, experts_w))
    assert out.shape == (B, H, N, D_OUT), out.shape

    NT = B * N
    m = N // E
    x_flat = x.reshape(NT, D_IN)

    # ---- check 1: fused gating+sinkhorn kernel vs log-domain f32 reference ----
    w_gate = jnp.transpose(gate_w, (0, 2, 1)).reshape(H * E, D_IN).astype(jnp.bfloat16)
    cg = jax.block_until_ready(
        gate_and_sinkhorn(x_flat.astype(jnp.bfloat16), w_gate, heads=H, experts=E))

    ref_gates = jnp.einsum('nd,hde->hne', x_flat.astype(jnp.bfloat16),
                           gate_w.astype(jnp.bfloat16),
                           preferred_element_type=jnp.float32)               # (H, NT, E)
    t = jnp.log(jnp.maximum(ref_gates, EPS)) / TEMPERATURE
    for _ in range(SINKHORN_ITERS):
        t = t - jax.nn.logsumexp(t, axis=-2, keepdims=True)
        t = t - jax.nn.logsumexp(t, axis=-1, keepdims=True)
    ref_cg = jnp.transpose(jnp.exp(t), (0, 2, 1))                            # (H, E, NT)
    assert float(jnp.max(jnp.abs(cg - ref_cg))) < 2e-2, "sinkhorn mismatch"
    row_sums = jnp.sum(cg, axis=1)                                           # per-token over E
    assert float(jnp.max(jnp.abs(row_sums - 1.0))) < 1e-2, "rows not normalized"

    # ---- check 2: routed expert path (DMA gather + bf16 matmul + scatter) ----
    gate_vals, routed_idx = lax.top_k(cg, m)
    hard = (gate_vals > 0.5).astype(jnp.float32)
    routed = x_flat[routed_idx]                                              # (H, E, m, D)
    ref_eo = jnp.einsum('hemi,ehio->hemo', routed.astype(jnp.bfloat16),
                        experts_w.astype(jnp.bfloat16),
                        preferred_element_type=jnp.float32)
    src = (ref_eo * hard[..., None]).transpose(0, 2, 1, 3).reshape(H, m * E, D_OUT)
    idx_flat = jnp.transpose(routed_idx, (0, 2, 1)).reshape(H, m * E)

    def scatter_head(idx_h, src_h):
        sums = jnp.zeros((NT, D_OUT), jnp.float32).at[idx_h].add(src_h)
        counts = jnp.zeros((NT,), jnp.float32).at[idx_h].add(1.0)
        return sums / (counts[:, None] + 1.0)

    ref_out = jax.vmap(scatter_head)(idx_flat, src).reshape(H, B, N, D_OUT)
    ref_out = jnp.transpose(ref_out, (1, 0, 2, 3))
    assert float(jnp.max(jnp.abs(out - ref_out))) < 5e-3, "expert path mismatch"

    print("KERNEL_OK")
</pallas_src>

<mosaic_0001>
module attributes {stable_mosaic.version = 11 : i64} {
  func.func @_gate_sinkhorn_kernel(%arg0: i32, %arg1: memref<512x256xbf16, #tpu.memory_space<vmem>>, %arg2: memref<16x256xbf16, #tpu.memory_space<vmem>>, %arg3: memref<2x1x8x512xf32, #tpu.memory_space<vmem>>) attributes {dimension_semantics = [#tpu.dimension_semantics<arbitrary>], iteration_bounds = array<i64: 1>, scalar_prefetch = 0 : i64, scratch_operands = 0 : i64, tpu.core_type = #tpu.core_type<tc>, window_params = [{transform_indices = @transform_0, window_bounds = array<i64: 512, 256>}, {pipeline_mode = #tpu.pipeline_mode<synchronous>, transform_indices = @transform_1, window_bounds = array<i64: 16, 256>}, {pipeline_mode = #tpu.pipeline_mode<synchronous>, transform_indices = @transform_2, window_bounds = array<i64: 2, 1, 8, 512>}]} {
    %c0 = arith.constant 0 : index
    %c0_0 = arith.constant 0 : index
    %0 = vector.load %arg2[%c0, %c0_0] : memref<16x256xbf16, #tpu.memory_space<vmem>>, vector<16x256xbf16>
    %c0_1 = arith.constant 0 : index
    %c0_2 = arith.constant 0 : index
    %1 = vector.load %arg1[%c0_1, %c0_2] : memref<512x256xbf16, #tpu.memory_space<vmem>>, vector<512x256xbf16>
    %cst = arith.constant dense<0.000000e+00> : vector<16x512xf32>
    %2 = tpu.matmul %0, %1, %cst {dimension_numbers = #tpu.dot_dimension_numbers<[1], [1], [0], [0], [0, 0, 1, 0], [], []>} : vector<16x256xbf16>, vector<512x256xbf16>, vector<16x512xf32> -> vector<16x512xf32>
    %3 = vector.extract_strided_slice %2 {offsets = [0, 0], sizes = [8, 512], strides = [1, 1]} : vector<16x512xf32> to vector<8x512xf32>
    %c0_3 = arith.constant 0 : index
    %4 = arith.index_cast %arg0 : i32 to index
    %c0_4 = arith.constant 0 : index
    %c0_5 = arith.constant 0 : index
    %5 = vector.load %arg3[%c0_3, %4, %c0_4, %c0_5] : memref<2x1x8x512xf32, #tpu.memory_space<vmem>>, vector<1x1x8x512xf32>
    %6 = vector.shape_cast %5 : vector<1x1x8x512xf32> to vector<8x512xf32>
    %7 = vector.shape_cast %3 : vector<8x512xf32> to vector<1x1x8x512xf32>
    tpu.vector_store %arg3[%c0_3, %4, %c0_4, %c0_5], %7 {strides = array<i32>} : memref<2x1x8x512xf32, #tpu.memory_space<vmem>>, vector<1x1x8x512xf32>,
    %8 = vector.extract_strided_slice %2 {offsets = [8, 0], sizes = [8, 512], strides = [1, 1]} : vector<16x512xf32> to vector<8x512xf32>
    %c1 = arith.constant 1 : index
    %9 = arith.index_cast %arg0 : i32 to index
    %c0_6 = arith.constant 0 : index
    %c0_7 = arith.constant 0 : index
    %10 = vector.load %arg3[%c1, %9, %c0_6, %c0_7] : memref<2x1x8x512xf32, #tpu.memory_space<vmem>>, vector<1x1x8x512xf32>
    %11 = vector.shape_cast %10 : vector<1x1x8x512xf32> to vector<8x512xf32>
    %12 = vector.shape_cast %8 : vector<8x512xf32> to vector<1x1x8x512xf32>
    tpu.vector_store %arg3[%c1, %9, %c0_6, %c0_7], %12 {strides = array<i32>} : memref<2x1x8x512xf32, #tpu.memory_space<vmem>>, vector<1x1x8x512xf32>,
    %c0_i32 = arith.constant 0 : i32
    %13 = arith.cmpi eq, %arg0, %c0_i32 : i32
    %14 = arith.extui %13 : i1 to i32
    %c0_i32_8 = arith.constant 0 : i32
    %15 = arith.cmpi ne, %14, %c0_i32_8 : i32
    scf.if %15 {
      %c0_9 = arith.constant 0 : index
      %c0_10 = arith.constant 0 : index
      %c0_11 = arith.constant 0 : index
      %c0_12 = arith.constant 0 : index
      %16 = vector.load %arg3[%c0_9, %c0_10, %c0_11, %c0_12] : memref<2x1x8x512xf32, #tpu.memory_space<vmem>>, vector<2x1x8x512xf32>
      %cst_13 = arith.constant 1.000000e-10 : f32
      %17 = vector.broadcast %cst_13 : f32 to vector<2x1x8x512xf32>
      %18 = arith.maximumf %16, %17 : vector<2x1x8x512xf32>
      %c0_14 = arith.constant 0 : index
      %c0_15 = arith.constant 0 : index
      %c0_16 = arith.constant 0 : index
      %c0_17 = arith.constant 0 : index
      %19 = vector.load %arg3[%c0_14, %c0_15, %c0_16, %c0_17] : memref<2x1x8x512xf32, #tpu.memory_space<vmem>>, vector<2x1x8x512xf32>
      tpu.vector_store %arg3[%c0_14, %c0_15, %c0_16, %c0_17], %18 {strides = array<i32>} : memref<2x1x8x512xf32, #tpu.memory_space<vmem>>, vector<2x1x8x512xf32>,
      %c0_i32_18 = arith.constant 0 : i32
      %c7_i32 = arith.constant 7 : i32
      %20 = arith.addi %c0_i32_18, %c7_i32 : i32
      %c1_i32 = arith.constant 1 : i32
      scf.for %arg4 = %c0_i32_18 to %20 step %c1_i32  : i32 {
        %c0_30 = arith.constant 0 : index
        %c0_31 = arith.constant 0 : index
        %c0_32 = arith.constant 0 : index
        %c0_33 = arith.constant 0 : index
        %33 = vector.load %arg3[%c0_30, %c0_31, %c0_32, %c0_33] : memref<2x1x8x512xf32, #tpu.memory_space<vmem>>, vector<2x1x8x512xf32>
        %cst_34 = arith.constant dense<0.000000e+00> : vector<2x8x512xf32>
        %34 = vector.multi_reduction <add>, %33, %cst_34 [1] : vector<2x1x8x512xf32> to vector<2x8x512xf32>
        %35 = vector.shape_cast %34 : vector<2x8x512xf32> to vector<2x1x8x512xf32>
        %cst_35 = arith.constant dense<0.000000e+00> : vector<2x1x8xf32>
        %36 = vector.multi_reduction <add>, %35, %cst_35 [3] : vector<2x1x8x512xf32> to vector<2x1x8xf32>
        %37 = vector.shape_cast %36 : vector<2x1x8xf32> to vector<2x1x8x1xf32>
        %38 = tpu.reciprocal %37 {approx = true} : vector<2x1x8x1xf32> -> vector<2x1x8x1xf32>
        %39 = vector.broadcast %38 : vector<2x1x8x1xf32> to vector<2x1x8x512xf32>
        %40 = arith.mulf %33, %39 : vector<2x1x8x512xf32>
        %cst_36 = arith.constant dense<0.000000e+00> : vector<2x1x512xf32>
        %41 = vector.multi_reduction <add>, %40, %cst_36 [2] : vector<2x1x8x512xf32> to vector<2x1x512xf32>
        %42 = vector.shape_cast %41 : vector<2x1x512xf32> to vector<2x1x1x512xf32>
        %43 = tpu.reciprocal %42 {approx = true} : vector<2x1x1x512xf32> -> vector<2x1x1x512xf32>
        %44 = vector.broadcast %43 : vector<2x1x1x512xf32> to vector<2x1x8x512xf32>
        %45 = arith.mulf %40, %44 : vector<2x1x8x512xf32>
        %c0_37 = arith.constant 0 : index
        %c0_38 = arith.constant 0 : index
        %c0_39 = arith.constant 0 : index
        %c0_40 = arith.constant 0 : index
        %46 = vector.load %arg3[%c0_37, %c0_38, %c0_39, %c0_40] : memref<2x1x8x512xf32, #tpu.memory_space<vmem>>, vector<2x1x8x512xf32>
        tpu.vector_store %arg3[%c0_37, %c0_38, %c0_39, %c0_40], %45 {strides = array<i32>} : memref<2x1x8x512xf32, #tpu.memory_space<vmem>>, vector<2x1x8x512xf32>,
      }
      %c0_19 = arith.constant 0 : index
      %c0_20 = arith.constant 0 : index
      %c0_21 = arith.constant 0 : index
      %c0_22 = arith.constant 0 : index
      %21 = vector.load %arg3[%c0_19, %c0_20, %c0_21, %c0_22] : memref<2x1x8x512xf32, #tpu.memory_space<vmem>>, vector<2x1x8x512xf32>
      %cst_23 = arith.constant dense<0.000000e+00> : vector<2x8x512xf32>
      %22 = vector.multi_reduction <add>, %21, %cst_23 [1] : vector<2x1x8x512xf32> to vector<2x8x512xf32>
      %23 = vector.shape_cast %22 : vector<2x8x512xf32> to vector<2x1x8x512xf32>
      %cst_24 = arith.constant dense<0.000000e+00> : vector<2x1x8xf32>
      %24 = vector.multi_reduction <add>, %23, %cst_24 [3] : vector<2x1x8x512xf32> to vector<2x1x8xf32>
      %25 = vector.shape_cast %24 : vector<2x1x8xf32> to vector<2x1x8x1xf32>
      %26 = vector.broadcast %25 : vector<2x1x8x1xf32> to vector<2x1x8x512xf32>
      %27 = arith.divf %21, %26 : vector<2x1x8x512xf32>
      %cst_25 = arith.constant dense<0.000000e+00> : vector<2x1x512xf32>
      %28 = vector.multi_reduction <add>, %27, %cst_25 [2] : vector<2x1x8x512xf32> to vector<2x1x512xf32>
      %29 = vector.shape_cast %28 : vector<2x1x512xf32> to vector<2x1x1x512xf32>
      %30 = vector.broadcast %29 : vector<2x1x1x512xf32> to vector<2x1x8x512xf32>
      %31 = arith.divf %27, %30 : vector<2x1x8x512xf32>
      %c0_26 = arith.constant 0 : index
      %c0_27 = arith.constant 0 : index
      %c0_28 = arith.constant 0 : index
      %c0_29 = arith.constant 0 : index
      %32 = vector.load %arg3[%c0_26, %c0_27, %c0_28, %c0_29] : memref<2x1x8x512xf32, #tpu.memory_space<vmem>>, vector<2x1x8x512xf32>
      tpu.vector_store %arg3[%c0_26, %c0_27, %c0_28, %c0_29], %31 {strides = array<i32>} : memref<2x1x8x512xf32, #tpu.memory_space<vmem>>, vector<2x1x8x512xf32>,
    } else {
    }
    return
  }
  func.func @transform_0(%arg0: i32) -> (i32, i32) {
    %c0_i32 = arith.constant 0 : i32
    %c0_i32_0 = arith.constant 0 : i32
    return %arg0, %c0_i32 : i32, i32
  }
  func.func @transform_1(%arg0: i32) -> (i32, i32) {
    %c0_i32 = arith.constant 0 : i32
    %c0_i32_0 = arith.constant 0 : i32
    %c0_i32_1 = arith.constant 0 : i32
    return %c0_i32, %c0_i32_0 : i32, i32
  }
  func.func @transform_2(%arg0: i32) -> (i32, i32, i32, i32) {
    %c0_i32 = arith.constant 0 : i32
    %c0_i32_0 = arith.constant 0 : i32
    %c0_i32_1 = arith.constant 0 : i32
    %c0_i32_2 = arith.constant 0 : i32
    %c0_i32_3 = arith.constant 0 : i32
    return %c0_i32, %c0_i32_0, %c0_i32_1, %c0_i32_2 : i32, i32, i32, i32
  }
}

</mosaic_0001>

<llo_original>
// kernel: tpu_custom_call.1
$region0: #{tpu_custom_call.1}
  #allocation0 [shape = 'u32[]', space=smem, size = 0x4, offset = 0x4, fixed_abs, tag = 'smem constant byte address 0x4 - core index']
  #allocation1 [shape = 'u32[144,128]{1,0:T(1,128)}', space=vmem, size = 0x12000, scoped, tag = 'internal scratch']
  %s0 = inlined_call_operand.hbm [shape: bf16[512,256], index: 0, kind: input, shape index: {}]
  %s1 = inlined_call_operand.hbm [shape: bf16[16,256], index: 1, kind: input, shape index: {}]
  %s2 = inlined_call_operand.hbm [shape: f32[2,1,8,512], index: 2, kind: output, shape index: {}]
  %s3 = sld [smem:[#allocation0]]
  $region37: #{tpu_custom_call.1} parent=0
    _
  %s5 = ssub.s32 1, %s3
  %s6 = scalar_select 0, %s5, %s3
  $region1: #{tpu_custom_call.1} parent=0
    #allocation2 [shape = 'u8[262144]{0}', space=vmem, size = 0x40000, scoped, tag = 'input window, operand 0, single buffered']
    #allocation3 [shape = 's32[1]{0}', space=sflag, size = 0x4, scoped, tag = 'scoped memory for tpu_custom_call.1']
    #allocation4 [shape = 's32[1]{0}', space=sflag, size = 0x4, scoped, tag = 'scoped memory for tpu_custom_call.1']
    #allocation5 [shape = 'u8[8192]{0}', space=vmem, size = 0x2000, scoped, tag = 'input window, operand 1, single buffered']
    #allocation6 [shape = 's32[1]{0}', space=sflag, size = 0x4, scoped, tag = 'scoped memory for tpu_custom_call.1']
    #allocation7 [shape = 'u8[32768]{0}', space=vmem, size = 0x8000, scoped, tag = 'output window, operand 0, single buffered']
    %7 = vsyncpa [#allocation3], 0
    %8 = vsyncpa [#allocation6], 0
    %9 = vsyncpa [#allocation4], 0
    // Predicated region
    $region2: #{tpu_custom_call.1} parent=1 // pred_check
      _
    $region3: #{tpu_custom_call.1} parent=1 // pred_check_branch
      %11 = sbr.rel (0) target = $region5
    $region4: #{tpu_custom_call.1} parent=1 // pred_region
      %s13 = ssub.s32 8192, 8192
      %14 = vsyncadd [#allocation3], %s13
      %s15 = sshll.u32 [#allocation2], 4
      %s16 = int_to_ptr.vmem [resolvable:$true] %s15
      %21 = dma.hbm_to_vmem [thread:$0]  %s0, 8192, %s16, [#allocation3], 128, 128, 8
    $region5: #{tpu_custom_call.1} parent=1 // pred_fallthru
      _
    // Predicated region
    $region6: #{tpu_custom_call.1} parent=1 // pred_check
      _
    $region7: #{tpu_custom_call.1} parent=1 // pred_check_branch
      %23 = sbr.rel (0) target = $region9
    $region8: #{tpu_custom_call.1} parent=1 // pred_region
      %s25 = ssub.s32 256, 256
      %26 = vsyncadd [#allocation6], %s25
      %s27 = sshll.u32 [#allocation5], 4
      %s28 = int_to_ptr.vmem [resolvable:$true] %s27
      %33 = dma.hbm_to_vmem [thread:$0]  %s1, 256, %s28, [#allocation6], 128, 128, 8
    $region9: #{tpu_custom_call.1} parent=1 // pred_fallthru
      _
    // Predicated region
    $region10: #{tpu_custom_call.1} parent=1 // pred_check
      _
    $region11: #{tpu_custom_call.1} parent=1 // pred_check_branch
      %35 = sbr.rel (0) target = $region13
    $region12: #{tpu_custom_call.1} parent=1 // pred_region
      %36 = dma.done [#allocation3], 8192
    $region13: #{tpu_custom_call.1} parent=1 // pred_fallthru
      _
    // Predicated region
    $region14: #{tpu_custom_call.1} parent=1 // pred_check
      _
    $region15: #{tpu_custom_call.1} parent=1 // pred_check_branch
      %38 = sbr.rel (0) target = $region17
    $region16: #{tpu_custom_call.1} parent=1 // pred_region
      %39 = dma.done [#allocation6], 256
    $region17: #{tpu_custom_call.1} parent=1 // pred_fallthru
      _
    %v40 = vld [vmem:[#allocation5] sm:$0xff]
    %v41 = vld [vmem:[#allocation5 + $0x8] sm:$0xff]
    %v42 = vld [vmem:[#allocation2] sm:$0xff]
    %v43 = vld [vmem:[#allocation2 + $0x8] sm:$0xff]
    %v44 = vld [vmem:[#allocation2 + $0x10] sm:$0xff]
    %v45 = vld [vmem:[#allocation2 + $0x18] sm:$0xff]
    %v46 = vld [vmem:[#allocation2 + $0x20] sm:$0xff]
    %v47 = vld [vmem:[#allocation2 + $0x28] sm:$0xff]
    %v48 = vld [vmem:[#allocation2 + $0x30] sm:$0xff]
    %v49 = vld [vmem:[#allocation2 + $0x38] sm:$0xff]
    %v50 = vld [vmem:[#allocation2 + $0x40] sm:$0xff]
    %v51 = vld [vmem:[#allocation2 + $0x48] sm:$0xff]
    %v52 = vld [vmem:[#allocation2 + $0x50] sm:$0xff]
    %v53 = vld [vmem:[#allocation2 + $0x58] sm:$0xff]
    %v54 = vld [vmem:[#allocation2 + $0x60] sm:$0xff]
    %v55 = vld [vmem:[#allocation2 + $0x68] sm:$0xff]
    %v56 = vld [vmem:[#allocation2 + $0x70] sm:$0xff]
    %v57 = vld [vmem:[#allocation2 + $0x78] sm:$0xff]
    %v58 = vld [vmem:[#allocation2 + $0x80] sm:$0xff]
    %v59 = vld [vmem:[#allocation2 + $0x88] sm:$0xff]
    %v60 = vld [vmem:[#allocation2 + $0x90] sm:$0xff]
    %v61 = vld [vmem:[#allocation2 + $0x98] sm:$0xff]
    %v62 = vld [vmem:[#allocation2 + $0xa0] sm:$0xff]
    %v63 = vld [vmem:[#allocation2 + $0xa8] sm:$0xff]
    %v64 = vld [vmem:[#allocation2 + $0xb0] sm:$0xff]
    %v65 = vld [vmem:[#allocation2 + $0xb8] sm:$0xff]
    %v66 = vld [vmem:[#allocation2 + $0xc0] sm:$0xff]
    %v67 = vld [vmem:[#allocation2 + $0xc8] sm:$0xff]
    %v68 = vld [vmem:[#allocation2 + $0xd0] sm:$0xff]
    %v69 = vld [vmem:[#allocation2 + $0xd8] sm:$0xff]
    %v70 = vld [vmem:[#allocation2 + $0xe0] sm:$0xff]
    %v71 = vld [vmem:[#allocation2 + $0xe8] sm:$0xff]
    %v72 = vld [vmem:[#allocation2 + $0xf0] sm:$0xff]
    %v73 = vld [vmem:[#allocation2 + $0xf8] sm:$0xff]
    %v74 = vld [vmem:[#allocation2 + $0x100] sm:$0xff]
    %v75 = vld [vmem:[#allocation2 + $0x108] sm:$0xff]
    %v76 = vld [vmem:[#allocation2 + $0x110] sm:$0xff]
    %v77 = vld [vmem:[#allocation2 + $0x118] sm:$0xff]
    %v78 = vld [vmem:[#allocation2 + $0x120] sm:$0xff]
    %v79 = vld [vmem:[#allocation2 + $0x128] sm:$0xff]
    %v80 = vld [vmem:[#allocation2 + $0x130] sm:$0xff]
    %v81 = vld [vmem:[#allocation2 + $0x138] sm:$0xff]
    %v82 = vld [vmem:[#allocation2 + $0x140] sm:$0xff]
    %v83 = vld [vmem:[#allocation2 + $0x148] sm:$0xff]
    %v84 = vld [vmem:[#allocation2 + $0x150] sm:$0xff]
    %v85 = vld [vmem:[#allocation2 + $0x158] sm:$0xff]
    %v86 = vld [vmem:[#allocation2 + $0x160] sm:$0xff]
    %v87 = vld [vmem:[#allocation2 + $0x168] sm:$0xff]
    %v88 = vld [vmem:[#allocation2 + $0x170] sm:$0xff]
    %v89 = vld [vmem:[#allocation2 + $0x178] sm:$0xff]
    %v90 = vld [vmem:[#allocation2 + $0x180] sm:$0xff]
    %v91 = vld [vmem:[#allocation2 + $0x188] sm:$0xff]
    %v92 = vld [vmem:[#allocation2 + $0x190] sm:$0xff]
    %v93 = vld [vmem:[#allocation2 + $0x198] sm:$0xff]
    %v94 = vld [vmem:[#allocation2 + $0x1a0] sm:$0xff]
    %v95 = vld [vmem:[#allocation2 + $0x1a8] sm:$0xff]
    %v96 = vld [vmem:[#allocation2 + $0x1b0] sm:$0xff]
    %v97 = vld [vmem:[#allocation2 + $0x1b8] sm:$0xff]
    %v98 = vld [vmem:[#allocation2 + $0x1c0] sm:$0xff]
    %v99 = vld [vmem:[#allocation2 + $0x1c8] sm:$0xff]
    %v100 = vld [vmem:[#allocation2 + $0x1d0] sm:$0xff]
    %v101 = vld [vmem:[#allocation2 + $0x1d8] sm:$0xff]
    %v102 = vld [vmem:[#allocation2 + $0x1e0] sm:$0xff]
    %v103 = vld [vmem:[#allocation2 + $0x1e8] sm:$0xff]
    %v104 = vld [vmem:[#allocation2 + $0x1f0] sm:$0xff]
    %v105 = vld [vmem:[#allocation2 + $0x1f8] sm:$0xff]
    %v108 = vunpack.c.l.b16 %v40
    %v109 = vunpack.c.h.b16 %v40
    %v110 = vunpack.c.l.b16 %v41
    %v111 = vunpack.c.h.b16 %v41
    %v112 = vpack.c.b16 %v110, %v108
    %v113 = vpack.c.b16 %v111, %v109
    %v180 = vunpack.c.l.b16 %v42
    %v181 = vunpack.c.h.b16 %v42
    %v182 = vunpack.c.l.b16 %v43
    %v183 = vunpack.c.h.b16 %v43
    %v184 = vunpack.c.l.b16 %v44
    %v185 = vunpack.c.h.b16 %v44
    %v186 = vunpack.c.l.b16 %v45
    %v187 = vunpack.c.h.b16 %v45
    %v188 = vunpack.c.l.b16 %v46
    %v189 = vunpack.c.h.b16 %v46
    %v190 = vunpack.c.l.b16 %v47
    %v191 = vunpack.c.h.b16 %v47
    %v192 = vunpack.c.l.b16 %v48
    %v193 = vunpack.c.h.b16 %v48
    %v194 = vunpack.c.l.b16 %v49
    %v195 = vunpack.c.h.b16 %v49
    %v196 = vunpack.c.l.b16 %v50
    %v197 = vunpack.c.h.b16 %v50
    %v198 = vunpack.c.l.b16 %v51
    %v199 = vunpack.c.h.b16 %v51
    %v200 = vunpack.c.l.b16 %v52
    %v201 = vunpack.c.h.b16 %v52
    %v202 = vunpack.c.l.b16 %v53
    %v203 = vunpack.c.h.b16 %v53
    %v204 = vunpack.c.l.b16 %v54
    %v205 = vunpack.c.h.b16 %v54
    %v206 = vunpack.c.l.b16 %v55
    %v207 = vunpack.c.h.b16 %v55
    %v208 = vunpack.c.l.b16 %v56
    %v209 = vunpack.c.h.b16 %v56
    %v210 = vunpack.c.l.b16 %v57
    %v211 = vunpack.c.h.b16 %v57
    %v212 = vunpack.c.l.b16 %v58
    %v213 = vunpack.c.h.b16 %v58
    %v214 = vunpack.c.l.b16 %v59
    %v215 = vunpack.c.h.b16 %v59
    %v216 = vunpack.c.l.b16 %v60
    %v217 = vunpack.c.h.b16 %v60
    %v218 = vunpack.c.l.b16 %v61
    %v219 = vunpack.c.h.b16 %v61
    %v220 = vunpack.c.l.b16 %v62
    %v221 = vunpack.c.h.b16 %v62
    %v222 = vunpack.c.l.b16 %v63
    %v223 = vunpack.c.h.b16 %v63
    %v224 = vunpack.c.l.b16 %v64
    %v225 = vunpack.c.h.b16 %v64
    %v226 = vunpack.c.l.b16 %v65
    %v227 = vunpack.c.h.b16 %v65
    %v228 = vunpack.c.l.b16 %v66
    %v229 = vunpack.c.h.b16 %v66
    %v230 = vunpack.c.l.b16 %v67
    %v231 = vunpack.c.h.b16 %v67
    %v232 = vunpack.c.l.b16 %v68
    %v233 = vunpack.c.h.b16 %v68
    %v234 = vunpack.c.l.b16 %v69
    %v235 = vunpack.c.h.b16 %v69
    %v236 = vunpack.c.l.b16 %v70
    %v237 = vunpack.c.h.b16 %v70
    %v238 = vunpack.c.l.b16 %v71
    %v239 = vunpack.c.h.b16 %v71
    %v240 = vunpack.c.l.b16 %v72
    %v241 = vunpack.c.h.b16 %v72
    %v242 = vunpack.c.l.b16 %v73
    %v243 = vunpack.c.h.b16 %v73
    %v244 = vunpack.c.l.b16 %v74
    %v245 = vunpack.c.h.b16 %v74
    %v246 = vunpack.c.l.b16 %v75
    %v247 = vunpack.c.h.b16 %v75
    %v248 = vunpack.c.l.b16 %v76
    %v249 = vunpack.c.h.b16 %v76
    %v250 = vunpack.c.l.b16 %v77
    %v251 = vunpack.c.h.b16 %v77
    %v252 = vunpack.c.l.b16 %v78
    %v253 = vunpack.c.h.b16 %v78
    %v254 = vunpack.c.l.b16 %v79
    %v255 = vunpack.c.h.b16 %v79
    %v256 = vunpack.c.l.b16 %v80
    %v257 = vunpack.c.h.b16 %v80
    %v258 = vunpack.c.l.b16 %v81
    %v259 = vunpack.c.h.b16 %v81
    %v260 = vunpack.c.l.b16 %v82
    %v261 = vunpack.c.h.b16 %v82
    %v262 = vunpack.c.l.b16 %v83
    %v263 = vunpack.c.h.b16 %v83
    %v264 = vunpack.c.l.b16 %v84
    %v265 = vunpack.c.h.b16 %v84
    %v266 = vunpack.c.l.b16 %v85
    %v267 = vunpack.c.h.b16 %v85
    %v268 = vunpack.c.l.b16 %v86
    %v269 = vunpack.c.h.b16 %v86
    %v270 = vunpack.c.l.b16 %v87
    %v271 = vunpack.c.h.b16 %v87
    %v272 = vunpack.c.l.b16 %v88
    %v273 = vunpack.c.h.b16 %v88
    %v274 = vunpack.c.l.b16 %v89
    %v275 = vunpack.c.h.b16 %v89
    %v276 = vunpack.c.l.b16 %v90
    %v277 = vunpack.c.h.b16 %v90
    %v278 = vunpack.c.l.b16 %v91
    %v279 = vunpack.c.h.b16 %v91
    %v280 = vunpack.c.l.b16 %v92
    %v281 = vunpack.c.h.b16 %v92
    %v282 = vunpack.c.l.b16 %v93
    %v283 = vunpack.c.h.b16 %v93
    %v284 = vunpack.c.l.b16 %v94
    %v285 = vunpack.c.h.b16 %v94
    %v286 = vunpack.c.l.b16 %v95
    %v287 = vunpack.c.h.b16 %v95
    %v288 = vunpack.c.l.b16 %v96
    %v289 = vunpack.c.h.b16 %v96
    %v290 = vunpack.c.l.b16 %v97
    %v291 = vunpack.c.h.b16 %v97
    %v292 = vunpack.c.l.b16 %v98
    %v293 = vunpack.c.h.b16 %v98
    %v294 = vunpack.c.l.b16 %v99
    %v295 = vunpack.c.h.b16 %v99
    %v296 = vunpack.c.l.b16 %v100
    %v297 = vunpack.c.h.b16 %v100
    %v298 = vunpack.c.l.b16 %v101
    %v299 = vunpack.c.h.b16 %v101
    %v300 = vunpack.c.l.b16 %v102
    %v301 = vunpack.c.h.b16 %v102
    %v302 = vunpack.c.l.b16 %v103
    %v303 = vunpack.c.h.b16 %v103
    %v304 = vunpack.c.l.b16 %v104
    %v305 = vunpack.c.h.b16 %v104
    %v306 = vunpack.c.l.b16 %v105
    %v307 = vunpack.c.h.b16 %v105
    %v308 = vpack.c.b16 %v182, %v180
    %v309 = vpack.c.b16 %v183, %v181
    %v310 = vpack.c.b16 %v186, %v184
    %v311 = vpack.c.b16 %v187, %v185
    %v312 = vpack.c.b16 %v190, %v188
    %v313 = vpack.c.b16 %v191, %v189
    %v314 = vpack.c.b16 %v194, %v192
    %v315 = vpack.c.b16 %v195, %v193
    %v316 = vpack.c.b16 %v198, %v196
    %v317 = vpack.c.b16 %v199, %v197
    %v318 = vpack.c.b16 %v202, %v200
    %v319 = vpack.c.b16 %v203, %v201
    %v320 = vpack.c.b16 %v206, %v204
    %v321 = vpack.c.b16 %v207, %v205
    %v322 = vpack.c.b16 %v210, %v208
    %v323 = vpack.c.b16 %v211, %v209
    %v324 = vpack.c.b16 %v214, %v212
    %v325 = vpack.c.b16 %v215, %v213
    %v326 = vpack.c.b16 %v218, %v216
    %v327 = vpack.c.b16 %v219, %v217
    %v328 = vpack.c.b16 %v222, %v220
    %v329 = vpack.c.b16 %v223, %v221
    %v330 = vpack.c.b16 %v226, %v224
    %v331 = vpack.c.b16 %v227, %v225
    %v332 = vpack.c.b16 %v230, %v228
    %v333 = vpack.c.b16 %v231, %v229
    %v334 = vpack.c.b16 %v234, %v232
    %v335 = vpack.c.b16 %v235, %v233
    %v336 = vpack.c.b16 %v238, %v236
    %v337 = vpack.c.b16 %v239, %v237
    %v338 = vpack.c.b16 %v242, %v240
    %v339 = vpack.c.b16 %v243, %v241
    %v340 = vpack.c.b16 %v246, %v244
    %v341 = vpack.c.b16 %v247, %v245
    %v342 = vpack.c.b16 %v250, %v248
    %v343 = vpack.c.b16 %v251, %v249
    %v344 = vpack.c.b16 %v254, %v252
    %v345 = vpack.c.b16 %v255, %v253
    %v346 = vpack.c.b16 %v258, %v256
    %v347 = vpack.c.b16 %v259, %v257
    %v348 = vpack.c.b16 %v262, %v260
    %v349 = vpack.c.b16 %v263, %v261
    %v350 = vpack.c.b16 %v266, %v264
    %v351 = vpack.c.b16 %v267, %v265
    %v352 = vpack.c.b16 %v270, %v268
    %v353 = vpack.c.b16 %v271, %v269
    %v354 = vpack.c.b16 %v274, %v272
    %v355 = vpack.c.b16 %v275, %v273
    %v356 = vpack.c.b16 %v278, %v276
    %v357 = vpack.c.b16 %v279, %v277
    %v358 = vpack.c.b16 %v282, %v280
    %v359 = vpack.c.b16 %v283, %v281
    %v360 = vpack.c.b16 %v286, %v284
    %v361 = vpack.c.b16 %v287, %v285
    %v362 = vpack.c.b16 %v290, %v288
    %v363 = vpack.c.b16 %v291, %v289
    %v364 = vpack.c.b16 %v294, %v292
    %v365 = vpack.c.b16 %v295, %v293
    %v366 = vpack.c.b16 %v298, %v296
    %v367 = vpack.c.b16 %v299, %v297
    %v368 = vpack.c.b16 %v302, %v300
    %v369 = vpack.c.b16 %v303, %v301
    %v370 = vpack.c.b16 %v306, %v304
    %v371 = vpack.c.b16 %v307, %v305
    %436 = vmatprep.subr.bf16.mxu0 %v309
    %437 = vmatpush1.bf16.xpose.msra.mxu0 %v308
    %438 = vmatprep.subr.bf16.mxu0 %v311
    %439 = vmatpush1.bf16.xpose.msra.mxu0 %v310
    %440 = vmatprep.subr.bf16.mxu0 %v313
    %441 = vmatpush1.bf16.xpose.msra.mxu0 %v312
    %442 = vmatprep.subr.bf16.mxu0 %v315
    %443 = vmatpush1.bf16.xpose.msra.mxu0 %v314
    %444 = vmatprep.subr.bf16.mxu0 %v317
    %445 = vmatpush1.bf16.xpose.msra.mxu0 %v316
    %446 = vmatprep.subr.bf16.mxu0 %v319
    %447 = vmatpush1.bf16.xpose.msra.mxu0 %v318
    %448 = vmatprep.subr.bf16.mxu0 %v321
    %449 = vmatpush1.bf16.xpose.msra.mxu0 %v320
    %450 = vmatprep.subr.bf16.mxu0 %v323
    %451 = vmatpush1.bf16.xpose.msra.mxu0 %v322
    %452 = vmatprep.subr.bf16.mxu0 %v325
    %453 = vmatpush1.bf16.xpose.msra.mxu0 %v324
    %454 = vmatprep.subr.bf16.mxu0 %v327
    %455 = vmatpush1.bf16.xpose.msra.mxu0 %v326
    %456 = vmatprep.subr.bf16.mxu0 %v329
    %457 = vmatpush1.bf16.xpose.msra.mxu0 %v328
    %458 = vmatprep.subr.bf16.mxu0 %v331
    %459 = vmatpush1.bf16.xpose.msra.mxu0 %v330
    %460 = vmatprep.subr.bf16.mxu0 %v333
    %461 = vmatpush1.bf16.xpose.msra.mxu0 %v332
    %462 = vmatprep.subr.bf16.mxu0 %v335
    %463 = vmatpush1.bf16.xpose.msra.mxu0 %v334
    %464 = vmatprep.subr.bf16.mxu0 %v337
    %465 = vmatpush1.bf16.xpose.msra.mxu0 %v336
    %466 = vmatprep.subr.bf16.mxu0 %v339
    %467 = vmatpush1.bf16.xpose.msra.mxu0 %v338
    %468 = vmatprep.mubr.bf16.mxu0 %v113
    %469 = vmatmul.mubr.bf16.gmra.mrb[0].mxu0 %v112
    %v470 = vpop.f32.mrb[0].mxu0
    %v471 = vadd.f32 0.0, %v470
    %v472 = vpop.f32.mrb[0].mxu0
    %v473 = vadd.f32 0.0, %v472
    %v474 = vpop.f32.mrb[0].mxu0
    %v475 = vadd.f32 0.0, %v474
    %v476 = vpop.f32.mrb[0].mxu0
    %v477 = vadd.f32 0.0, %v476
    %478 = vdwg.mxu0
    %479 = vmatprep.subr.bf16.mxu0 %v341
    %480 = vmatpush1.bf16.xpose.msra.mxu0 %v340
    %481 = vmatprep.subr.bf16.mxu0 %v343
    %482 = vmatpush1.bf16.xpose.msra.mxu0 %v342
    %483 = vmatprep.subr.bf16.mxu0 %v345
    %484 = vmatpush1.bf16.xpose.msra.mxu0 %v344
    %485 = vmatprep.subr.bf16.mxu0 %v347
    %486 = vmatpush1.bf16.xpose.msra.mxu0 %v346
    %487 = vmatprep.subr.bf16.mxu0 %v349
    %488 = vmatpush1.bf16.xpose.msra.mxu0 %v348
    %489 = vmatprep.subr.bf16.mxu0 %v351
    %490 = vmatpush1.bf16.xpose.msra.mxu0 %v350
    %491 = vmatprep.subr.bf16.mxu0 %v353
    %492 = vmatpush1.bf16.xpose.msra.mxu0 %v352
    %493 = vmatprep.subr.bf16.mxu0 %v355
    %494 = vmatpush1.bf16.xpose.msra.mxu0 %v354
    %495 = vmatprep.subr.bf16.mxu0 %v357
    %496 = vmatpush1.bf16.xpose.msra.mxu0 %v356
    %497 = vmatprep.subr.bf16.mxu0 %v359
    %498 = vmatpush1.bf16.xpose.msra.mxu0 %v358
    %499 = vmatprep.subr.bf16.mxu0 %v361
    %500 = vmatpush1.bf16.xpose.msra.mxu0 %v360
    %501 = vmatprep.subr.bf16.mxu0 %v363
    %502 = vmatpush1.bf16.xpose.msra.mxu0 %v362
    %503 = vmatprep.subr.bf16.mxu0 %v365
    %504 = vmatpush1.bf16.xpose.msra.mxu0 %v364
    %505 = vmatprep.subr.bf16.mxu0 %v367
    %506 = vmatpush1.bf16.xpose.msra.mxu0 %v366
    %507 = vmatprep.subr.bf16.mxu0 %v369
    %508 = vmatpush1.bf16.xpose.msra.mxu0 %v368
    %509 = vmatprep.subr.bf16.mxu0 %v371
    %510 = vmatpush1.bf16.xpose.msra.mxu0 %v370
    %511 = vmatprep.mubr.bf16.mxu0 %v113
    %512 = vmatmul.mubr.bf16.gmra.mrb[0].mxu0 %v112
    %v513 = vpop.f32.mrb[0].mxu0
    %v514 = vadd.f32 0.0, %v513
    %v515 = vpop.f32.mrb[0].mxu0
    %v516 = vadd.f32 0.0, %v515
    %v517 = vpop.f32.mrb[0].mxu0
    %v518 = vadd.f32 0.0, %v517
    %v519 = vpop.f32.mrb[0].mxu0
    %v520 = vadd.f32 0.0, %v519
    %521 = vdwg.mxu0
    %s522 = smul.u32 0, 4
    %s523 = smul.addr %s522, 8
    %s524 = scalar_lea.vmem [#allocation7], %s523
    %525 = vst [vmem:[%s524] sm:$0xff] %v471
    %526 = vst [vmem:[%s524 + $0x8] sm:$0xff] %v473
    %527 = vst [vmem:[%s524 + $0x10] sm:$0xff] %v514
    %528 = vst [vmem:[%s524 + $0x18] sm:$0xff] %v516
    %s529 = sadd.s32 %s522, 4
    %s530 = smul.addr %s529, 8
    %s531 = scalar_lea.vmem [#allocation7], %s530
    %532 = vst [vmem:[%s531] sm:$0xff] %v475
    %533 = vst [vmem:[%s531 + $0x8] sm:$0xff] %v477
    %534 = vst [vmem:[%s531 + $0x10] sm:$0xff] %v518
    %535 = vst [vmem:[%s531 + $0x18] sm:$0xff] %v520
    %p536 = scmp.eq.s32.totalorder 0, 0
    // Predicated region
    $region18: #{tpu_custom_call.1} parent=1 // pred_check
      %p537 = pneg %p536
    $region19: #{tpu_custom_call.1} parent=1 // pred_check_branch
      %539 = sbr.rel (%p537) target = $region21
    $region20: #{tpu_custom_call.1} parent=1 // pred_region
      %v540 = vld [vmem:[#allocation7] sm:$0xff]
      %v541 = vld [vmem:[#allocation7 + $0x8] sm:$0xff]
      %v542 = vld [vmem:[#allocation7 + $0x10] sm:$0xff]
      %v543 = vld [vmem:[#allocation7 + $0x18] sm:$0xff]
      %v544 = vld [vmem:[#allocation7 + $0x20] sm:$0xff]
      %v545 = vld [vmem:[#allocation7 + $0x28] sm:$0xff]
      %v546 = vld [vmem:[#allocation7 + $0x30] sm:$0xff]
      %v547 = vld [vmem:[#allocation7 + $0x38] sm:$0xff]
      %v548 = vmax.f32 %v540, 1e-10
      %v549 = vmax.f32 %v541, 1e-10
      %v550 = vmax.f32 %v542, 1e-10
      %v551 = vmax.f32 %v543, 1e-10
      %v552 = vmax.f32 %v544, 1e-10
      %v553 = vmax.f32 %v545, 1e-10
      %v554 = vmax.f32 %v546, 1e-10
      %v555 = vmax.f32 %v547, 1e-10
      %556 = vst [vmem:[#allocation7] sm:$0xff] %v548
      %557 = vst [vmem:[#allocation7 + $0x8] sm:$0xff] %v549
      %558 = vst [vmem:[#allocation7 + $0x10] sm:$0xff] %v550
      %559 = vst [vmem:[#allocation7 + $0x18] sm:$0xff] %v551
      %560 = vst [vmem:[#allocation7 + $0x20] sm:$0xff] %v552
      %561 = vst [vmem:[#allocation7 + $0x28] sm:$0xff] %v553
      %562 = vst [vmem:[#allocation7 + $0x30] sm:$0xff] %v554
      %563 = vst [vmem:[#allocation7 + $0x38] sm:$0xff] %v555
      loop: start=0, step=1, limit=7
      $region22: #{tpu_custom_call.1} parent=20 // loop_pre_header
        _
      $region23: #{tpu_custom_call.1} parent=20 // loop_header
        %s565 = sphi 0, %s569
        %p566 = scmp.ge.s32.totalorder %s565, 7
      $region24: #{tpu_custom_call.1} parent=20 // loop_header_branch
        %568 = sbr.rel (%p566) target = $region28
      $region25: #{tpu_custom_call.1} parent=20 // loop_body
        %v570 = vld [vmem:[#allocation7] sm:$0xff]
        %v571 = vld [vmem:[#allocation7 + $0x8] sm:$0xff]
        %v572 = vld [vmem:[#allocation7 + $0x10] sm:$0xff]
        %v573 = vld [vmem:[#allocation7 + $0x18] sm:$0xff]
        %v574 = vld [vmem:[#allocation7 + $0x20] sm:$0xff]
        %v575 = vld [vmem:[#allocation7 + $0x28] sm:$0xff]
        %v576 = vld [vmem:[#allocation7 + $0x30] sm:$0xff]
        %v577 = vld [vmem:[#allocation7 + $0x38] sm:$0xff]
        %v578 = vadd.f32 %v570, 0.0
        %v579 = vadd.f32 %v571, 0.0
        %v580 = vadd.f32 %v572, 0.0
        %v581 = vadd.f32 %v573, 0.0
        %v582 = vadd.f32 %v574, 0.0
        %v583 = vadd.f32 %v575, 0.0
        %v584 = vadd.f32 %v576, 0.0
        %v585 = vadd.f32 %v577, 0.0
        %v586 = vadd.f32 %v578, %v579
        %v587 = vadd.f32 %v586, %v580
        %v588 = vadd.f32 %v587, %v581
        %589 = vadd.xlane.f32.xlu0 %v588
        %v590 = vpop.xlane.xlu0 %589
        %v591 = vadd.f32 %v582, %v583
        %v592 = vadd.f32 %v591, %v584
        %v593 = vadd.f32 %v592, %v585
        %594 = vadd.xlane.f32.xlu0 %v593
        %v595 = vpop.xlane.xlu0 %594
        %v596 = vrcp.pop %v590
        %v597 = vrcp.pop %v595
        %v598 = vmul.f32 %v570, %v596
        %v599 = vmul.f32 %v571, %v596
        %v600 = vmul.f32 %v572, %v596
        %v601 = vmul.f32 %v573, %v596
        %v602 = vmul.f32 %v574, %v597
        %v603 = vmul.f32 %v575, %v597
        %v604 = vmul.f32 %v576, %v597
        %v605 = vmul.f32 %v577, %v597
        %v606 = vrot.slane %v598, 4
        %v607 = vadd.f32 %v598, %v606
        %v608 = vrot.slane %v607, 2
        %v609 = vadd.f32 %v607, %v608
        %v610 = vrot.slane %v609, 1
        %v611 = vadd.f32 %v609, %v610
        %v612 = vrot.slane %v599, 4
        %v613 = vadd.f32 %v599, %v612
        %v614 = vrot.slane %v613, 2
        %v615 = vadd.f32 %v613, %v614
        %v616 = vrot.slane %v615, 1
        %v617 = vadd.f32 %v615, %v616
        %v618 = vrot.slane %v600, 4
        %v619 = vadd.f32 %v600, %v618
        %v620 = vrot.slane %v619, 2
        %v621 = vadd.f32 %v619, %v620
        %v622 = vrot.slane %v621, 1
        %v623 = vadd.f32 %v621, %v622
        %v624 = vrot.slane %v601, 4
        %v625 = vadd.f32 %v601, %v624
        %v626 = vrot.slane %v625, 2
        %v627 = vadd.f32 %v625, %v626
        %v628 = vrot.slane %v627, 1
        %v629 = vadd.f32 %v627, %v628
        %v630 = vrot.slane %v602, 4
        %v631 = vadd.f32 %v602, %v630
        %v632 = vrot.slane %v631, 2
        %v633 = vadd.f32 %v631, %v632
        %v634 = vrot.slane %v633, 1
        %v635 = vadd.f32 %v633, %v634
        %v636 = vrot.slane %v603, 4
        %v637 = vadd.f32 %v603, %v636
        %v638 = vrot.slane %v637, 2
        %v639 = vadd.f32 %v637, %v638
        %v640 = vrot.slane %v639, 1
        %v641 = vadd.f32 %v639, %v640
        %v642 = vrot.slane %v604, 4
        %v643 = vadd.f32 %v604, %v642
        %v644 = vrot.slane %v643, 2
        %v645 = vadd.f32 %v643, %v644
        %v646 = vrot.slane %v645, 1
        %v647 = vadd.f32 %v645, %v646
        %v648 = vrot.slane %v605, 4
        %v649 = vadd.f32 %v605, %v648
        %v650 = vrot.slane %v649, 2
        %v651 = vadd.f32 %v649, %v650
        %v652 = vrot.slane %v651, 1
        %v653 = vadd.f32 %v651, %v652
        %v654 = vrcp.pop %v611
        %v655 = vrcp.pop %v617
        %v656 = vrcp.pop %v623
        %v657 = vrcp.pop %v629
        %v658 = vrcp.pop %v635
        %v659 = vrcp.pop %v641
        %v660 = vrcp.pop %v647
        %v661 = vrcp.pop %v653
        %v662 = vmul.f32 %v598, %v654
        %v663 = vmul.f32 %v599, %v655
        %v664 = vmul.f32 %v600, %v656
        %v665 = vmul.f32 %v601, %v657
        %v666 = vmul.f32 %v602, %v658
        %v667 = vmul.f32 %v603, %v659
        %v668 = vmul.f32 %v604, %v660
        %v669 = vmul.f32 %v605, %v661
        %670 = vst [vmem:[#allocation7] sm:$0xff] %v662
        %671 = vst [vmem:[#allocation7 + $0x8] sm:$0xff] %v663
        %672 = vst [vmem:[#allocation7 + $0x10] sm:$0xff] %v664
        %673 = vst [vmem:[#allocation7 + $0x18] sm:$0xff] %v665
        %674 = vst [vmem:[#allocation7 + $0x20] sm:$0xff] %v666
        %675 = vst [vmem:[#allocation7 + $0x28] sm:$0xff] %v667
        %676 = vst [vmem:[#allocation7 + $0x30] sm:$0xff] %v668
        %677 = vst [vmem:[#allocation7 + $0x38] sm:$0xff] %v669
      $region26: #{tpu_custom_call.1} parent=20 // loop_footer
        %s569 = sadd.s32 1, %s565
      $region27: #{tpu_custom_call.1} parent=20 // loop_footer_branch
        %564 = sbr.rel target = $region23
      $region28: #{tpu_custom_call.1} parent=20 // loop_exit
        _
      %v678 = vld [vmem:[#allocation7] sm:$0xff]
      %v679 = vld [vmem:[#allocation7 + $0x8] sm:$0xff]
      %v680 = vld [vmem:[#allocation7 + $0x10] sm:$0xff]
      %v681 = vld [vmem:[#allocation7 + $0x18] sm:$0xff]
      %v682 = vld [vmem:[#allocation7 + $0x20] sm:$0xff]
      %v683 = vld [vmem:[#allocation7 + $0x28] sm:$0xff]
      %v684 = vld [vmem:[#allocation7 + $0x30] sm:$0xff]
      %v685 = vld [vmem:[#allocation7 + $0x38] sm:$0xff]
      %v686 = vadd.f32 %v678, 0.0
      %v687 = vadd.f32 %v679, 0.0
      %v688 = vadd.f32 %v680, 0.0
      %v689 = vadd.f32 %v681, 0.0
      %v690 = vadd.f32 %v682, 0.0
      %v691 = vadd.f32 %v683, 0.0
      %v692 = vadd.f32 %v684, 0.0
      %v693 = vadd.f32 %v685, 0.0
      %v694 = vadd.f32 %v686, %v687
      %v695 = vadd.f32 %v694, %v688
      %v696 = vadd.f32 %v695, %v689
      %697 = vadd.xlane.f32.xlu0 %v696
      %v698 = vpop.xlane.xlu0 %697
      %v699 = vadd.f32 %v690, %v691
      %v700 = vadd.f32 %v699, %v692
      %v701 = vadd.f32 %v700, %v693
      %702 = vadd.xlane.f32.xlu0 %v701
      %v703 = vpop.xlane.xlu0 %702
      %v704 = vrcp.pop %v698
      %v705 = vmul.f32 %v678, %v704
      %v706 = vmul.f32 %v679, %v704
      %v707 = vmul.f32 %v680, %v704
      %v708 = vmul.f32 %v681, %v704
      %v709 = vrcp.pop %v703
      %v710 = vmul.f32 %v682, %v709
      %v711 = vmul.f32 %v683, %v709
      %v712 = vmul.f32 %v684, %v709
      %v713 = vmul.f32 %v685, %v709
      %v714 = vrot.slane %v705, 4
      %v715 = vadd.f32 %v705, %v714
      %v716 = vrot.slane %v715, 2
      %v717 = vadd.f32 %v715, %v716
      %v718 = vrot.slane %v717, 1
      %v719 = vadd.f32 %v717, %v718
      %v720 = vrot.slane %v706, 4
      %v721 = vadd.f32 %v706, %v720
      %v722 = vrot.slane %v721, 2
      %v723 = vadd.f32 %v721, %v722
      %v724 = vrot.slane %v723, 1
      %v725 = vadd.f32 %v723, %v724
      %v726 = vrot.slane %v707, 4
      %v727 = vadd.f32 %v707, %v726
      %v728 = vrot.slane %v727, 2
      %v729 = vadd.f32 %v727, %v728
      %v730 = vrot.slane %v729, 1
      %v731 = vadd.f32 %v729, %v730
      %v732 = vrot.slane %v708, 4
      %v733 = vadd.f32 %v708, %v732
      %v734 = vrot.slane %v733, 2
      %v735 = vadd.f32 %v733, %v734
      %v736 = vrot.slane %v735, 1
      %v737 = vadd.f32 %v735, %v736
      %v738 = vrot.slane %v710, 4
      %v739 = vadd.f32 %v710, %v738
      %v740 = vrot.slane %v739, 2
      %v741 = vadd.f32 %v739, %v740
      %v742 = vrot.slane %v741, 1
      %v743 = vadd.f32 %v741, %v742
      %v744 = vrot.slane %v711, 4
      %v745 = vadd.f32 %v711, %v744
      %v746 = vrot.slane %v745, 2
      %v747 = vadd.f32 %v745, %v746
      %v748 = vrot.slane %v747, 1
      %v749 = vadd.f32 %v747, %v748
      %v750 = vrot.slane %v712, 4
      %v751 = vadd.f32 %v712, %v750
      %v752 = vrot.slane %v751, 2
      %v753 = vadd.f32 %v751, %v752
      %v754 = vrot.slane %v753, 1
      %v755 = vadd.f32 %v753, %v754
      %v756 = vrot.slane %v713, 4
      %v757 = vadd.f32 %v713, %v756
      %v758 = vrot.slane %v757, 2
      %v759 = vadd.f32 %v757, %v758
      %v760 = vrot.slane %v759, 1
      %v761 = vadd.f32 %v759, %v760
      %v762 = vrcp.pop %v719
      %v763 = vmul.f32 %v705, %v762
      %v764 = vrcp.pop %v725
      %v765 = vmul.f32 %v706, %v764
      %v766 = vrcp.pop %v731
      %v767 = vmul.f32 %v707, %v766
      %v768 = vrcp.pop %v737
      %v769 = vmul.f32 %v708, %v768
      %v770 = vrcp.pop %v743
      %v771 = vmul.f32 %v710, %v770
      %v772 = vrcp.pop %v749
      %v773 = vmul.f32 %v711, %v772
      %v774 = vrcp.pop %v755
      %v775 = vmul.f32 %v712, %v774
      %v776 = vrcp.pop %v761
      %v777 = vmul.f32 %v713, %v776
      %778 = vst [vmem:[#allocation7] sm:$0xff] %v763
      %779 = vst [vmem:[#allocation7 + $0x8] sm:$0xff] %v765
      %780 = vst [vmem:[#allocation7 + $0x10] sm:$0xff] %v767
      %781 = vst [vmem:[#allocation7 + $0x18] sm:$0xff] %v769
      %782 = vst [vmem:[#allocation7 + $0x20] sm:$0xff] %v771
      %783 = vst [vmem:[#allocation7 + $0x28] sm:$0xff] %v773
      %784 = vst [vmem:[#allocation7 + $0x30] sm:$0xff] %v775
      %785 = vst [vmem:[#allocation7 + $0x38] sm:$0xff] %v777
    $region21: #{tpu_custom_call.1} parent=1 // pred_fallthru
      _
    // Predicated region
    $region29: #{tpu_custom_call.1} parent=1 // pred_check
      _
    $region30: #{tpu_custom_call.1} parent=1 // pred_check_branch
      %787 = sbr.rel (0) target = $region32
    $region31: #{tpu_custom_call.1} parent=1 // pred_region
      %s789 = ssub.s32 1024, 1024
      %790 = vsyncadd [#allocation4], %s789
      %s791 = sshll.u32 [#allocation7], 4
      %s792 = int_to_ptr.vmem [resolvable:$true] %s791
      %797 = dma.vmem_to_hbm [thread:$0]  %s792, 1024, %s2, [#allocation4], 512, 512, 32
    $region32: #{tpu_custom_call.1} parent=1 // pred_fallthru
      _
    // Predicated region
    $region33: #{tpu_custom_call.1} parent=1 // pred_check
      _
    $region34: #{tpu_custom_call.1} parent=1 // pred_check_branch
      %799 = sbr.rel (0) target = $region36
    $region35: #{tpu_custom_call.1} parent=1 // pred_region
      %800 = dma.done [#allocation4], 1024
    $region36: #{tpu_custom_call.1} parent=1 // pred_fallthru
      _
    %801 = vsyncpa [#allocation3], 1
    %802 = vsyncpa [#allocation6], 1
    %803 = vsyncpa [#allocation4], 1

</llo_original>
